<compile_context>
chip_gen: v6e
topology: v6e:2x2x1
jax: 0.10.0
libtpu: 0.0.40
codegen_flags: <defaults>
</compile_context>

<pallas_src>
import jax
import jax.numpy as jnp
from jax.experimental import pallas as pl
from jax.experimental.pallas import tpu as pltpu

_LANE = 128     # lane width: output / contraction padding target
_SUBLANE = 8    # f32 sublane height: row padding target


def _round_up(x, m):
    return (x + m - 1) // m * m


def _linear_kernel(x_ref, w_ref, b_ref, o_ref):
    # x_ref: (S_pad, K_pad)   w_ref: (K_pad, N_pad)   b_ref: (1, N_pad)
    # o_ref: (S_pad, N_pad)   — all lane-dense, fully resident in VMEM.
    acc = jnp.dot(x_ref[...], w_ref[...], preferred_element_type=jnp.float32)
    o_ref[...] = (acc + b_ref[...]).astype(o_ref.dtype)


def classifier_forward(embedding_sq, weight_pad, bias_pad, n_classes):
    """embedding_sq: (seq, dim) f32; weight_pad: (K_pad, N_pad) f32 (zero-padded);
    bias_pad: (1, N_pad) f32 (zero-padded). Returns (seq, n_classes) f32."""
    seq, dim = embedding_sq.shape
    k_pad, n_pad = weight_pad.shape
    s_pad = _round_up(max(seq, _SUBLANE), _SUBLANE)

    # Zero-pad rows to a sublane multiple and the contraction dim to K_pad.
    # Zero padding contributes nothing to the matmul, so results are exact.
    x_pad = jnp.pad(
        embedding_sq.astype(jnp.float32),
        ((0, s_pad - seq), (0, k_pad - dim)),
    )

    out = pl.pallas_call(
        _linear_kernel,
        out_shape=jax.ShapeDtypeStruct((s_pad, n_pad), jnp.float32),
        # No grid: single invocation, whole arrays pinned in VMEM — no pipeline
        # scaffolding, no double-buffered DMAs for a ~70 KB working set.
        in_specs=[
            pl.BlockSpec(memory_space=pltpu.MemorySpace.VMEM),
            pl.BlockSpec(memory_space=pltpu.MemorySpace.VMEM),
            pl.BlockSpec(memory_space=pltpu.MemorySpace.VMEM),
        ],
        out_specs=pl.BlockSpec(memory_space=pltpu.MemorySpace.VMEM),
    )(x_pad, weight_pad, bias_pad)

    # Slice the logical result back out of the lane-dense block.
    return out[:seq, :n_classes]


class ClassificationModel:
    """JAX/Pallas port of the PyTorch ClassificationModel."""

    def __init__(self, dim=32, n_classes=5, key=None):
        if key is None:
            key = jax.random.PRNGKey(0)
        kw, kb = jax.random.split(key)
        self.dim = dim
        self.n_classes = n_classes

        # Deterministic init mimicking nn.Linear's uniform(-1/sqrt(dim), 1/sqrt(dim)).
        bound = 1.0 / (dim ** 0.5)
        # Logical parameters; weight stored pre-transposed: (dim, n_classes).
        self.weight_t = jax.random.uniform(
            kw, (dim, n_classes), jnp.float32, minval=-bound, maxval=bound
        )
        self.bias = jax.random.uniform(
            kb, (n_classes,), jnp.float32, minval=-bound, maxval=bound
        )

        # Padded, lane-dense copies consumed by the kernel (built once at init,
        # not per call). Padded rows/cols are zero so outputs are exact.
        k_pad = _round_up(dim, _LANE)
        n_pad = _round_up(n_classes, _LANE)
        self.weight_pad = (
            jnp.zeros((k_pad, n_pad), jnp.float32)
            .at[:dim, :n_classes].set(self.weight_t)
        )
        self.bias_pad = (
            jnp.zeros((1, n_pad), jnp.float32)
            .at[0, :n_classes].set(self.bias)
        )

    def __call__(self, idx, label, embedding):
        # label = torch.tensor(label)
        label = jnp.asarray(label)
        # embedding = embedding.squeeze(0)
        embedding_sq = jnp.squeeze(embedding, axis=0)
        classification_out = classifier_forward(
            embedding_sq, self.weight_pad, self.bias_pad, self.n_classes
        )
        return classification_out, label


if __name__ == "__main__":
    key = jax.random.PRNGKey(0)
    k_emb, k_model = jax.random.split(key)

    seq, dim, n_cls = 8, 32, 5
    # embedding as produced upstream: (1, seq, dim)
    embedding = jax.random.normal(k_emb, (1, seq, dim), jnp.float32)
    idx = 0
    label = 3

    model = ClassificationModel(dim=dim, n_classes=n_cls, key=k_model)
    out, lab = model(idx, label, embedding)
    out = jax.block_until_ready(out)
    lab = jax.block_until_ready(lab)

    # Reference check against plain JAX (unpadded parameters).
    ref = jnp.squeeze(embedding, 0) @ model.weight_t + model.bias
    assert out.shape == (seq, n_cls)
    assert jnp.allclose(out, ref, atol=1e-5, rtol=1e-5)
    assert int(lab) == label

    print("KERNEL_OK")
</pallas_src>

<mosaic_0001>
module attributes {stable_mosaic.version = 11 : i64} {
  func.func @_linear_kernel(%arg0: memref<8x128xf32, #tpu.memory_space<vmem>>, %arg1: memref<128x128xf32, #tpu.memory_space<vmem>>, %arg2: memref<1x128xf32, #tpu.memory_space<vmem>>, %arg3: memref<8x128xf32, #tpu.memory_space<vmem>>) attributes {dimension_semantics = [], scalar_prefetch = 0 : i64, scratch_operands = 0 : i64, tpu.core_type = #tpu.core_type<tc>} {
    %c0 = arith.constant 0 : index
    %c0_0 = arith.constant 0 : index
    %0 = vector.load %arg0[%c0, %c0_0] : memref<8x128xf32, #tpu.memory_space<vmem>>, vector<8x128xf32>
    %c0_1 = arith.constant 0 : index
    %c0_2 = arith.constant 0 : index
    %1 = vector.load %arg1[%c0_1, %c0_2] : memref<128x128xf32, #tpu.memory_space<vmem>>, vector<128x128xf32>
    %cst = arith.constant dense<0.000000e+00> : vector<8x128xf32>
    %2 = tpu.matmul %0, %1, %cst {dimension_numbers = #tpu.dot_dimension_numbers<[1], [0], [0], [1], [0, 0, 1, 1], [], []>} : vector<8x128xf32>, vector<128x128xf32>, vector<8x128xf32> -> vector<8x128xf32>
    %c0_3 = arith.constant 0 : index
    %c0_4 = arith.constant 0 : index
    %3 = vector.load %arg2[%c0_3, %c0_4] : memref<1x128xf32, #tpu.memory_space<vmem>>, vector<1x128xf32>
    %4 = vector.broadcast %3 : vector<1x128xf32> to vector<8x128xf32>
    %5 = arith.addf %2, %4 : vector<8x128xf32>
    %c0_5 = arith.constant 0 : index
    %c0_6 = arith.constant 0 : index
    %6 = vector.load %arg3[%c0_5, %c0_6] : memref<8x128xf32, #tpu.memory_space<vmem>>, vector<8x128xf32>
    tpu.vector_store %arg3[%c0_5, %c0_6], %5 {strides = array<i32>} : memref<8x128xf32, #tpu.memory_space<vmem>>, vector<8x128xf32>,
    return
  }
}

</mosaic_0001>

<llo_original>
// kernel: tpu_custom_call.1
$region0: #{tpu_custom_call.1}
  #allocation0 [shape = 'u32[]', space=smem, size = 0x4, offset = 0x4, fixed_abs, tag = 'smem constant byte address 0x4 - core index']
  #allocation1 [shape = 'u32[144,128]{1,0:T(1,128)}', space=vmem, size = 0x12000, scoped, tag = 'internal scratch']
  %s0 = inlined_call_operand.hbm [shape: f32[8,128], index: 0, kind: input, shape index: {}]
  %s1 = inlined_call_operand.hbm [shape: f32[128,128], index: 1, kind: input, shape index: {}]
  %s2 = inlined_call_operand.vmem [shape: f32[1,128], index: 2, kind: input, shape index: {}]
  %s3 = inlined_call_operand.hbm [shape: f32[8,128], index: 3, kind: output, shape index: {}]
  %s4 = sld [smem:[#allocation0]]
  $region30: #{tpu_custom_call.1} parent=0
    _
  %s6 = ssub.s32 1, %s4
  %s7 = scalar_select 0, %s6, %s4
  $region1: #{tpu_custom_call.1} parent=0
    #allocation2 [shape = 'u8[4096]{0}', space=vmem, size = 0x1000, scoped, tag = 'input window, operand 0, single buffered']
    #allocation3 [shape = 's32[1]{0}', space=sflag, size = 0x4, scoped, tag = 'scoped memory for tpu_custom_call.1']
    #allocation4 [shape = 's32[1]{0}', space=sflag, size = 0x4, scoped, tag = 'scoped memory for tpu_custom_call.1']
    #allocation5 [shape = 'u8[65536]{0}', space=vmem, size = 0x10000, scoped, tag = 'input window, operand 1, single buffered']
    #allocation6 [shape = 's32[1]{0}', space=sflag, size = 0x4, scoped, tag = 'scoped memory for tpu_custom_call.1']
    #allocation7 [shape = 'u8[4096]{0}', space=vmem, size = 0x1000, scoped, tag = 'output window, operand 0, single buffered']
    %8 = vsyncpa [#allocation3], 0
    %9 = vsyncpa [#allocation6], 0
    %10 = vsyncpa [#allocation4], 0
    // Predicated region
    $region2: #{tpu_custom_call.1} parent=1 // pred_check
      _
    $region3: #{tpu_custom_call.1} parent=1 // pred_check_branch
      %12 = sbr.rel (0) target = $region5
    $region4: #{tpu_custom_call.1} parent=1 // pred_region
      %s14 = ssub.s32 128, 128
      %15 = vsyncadd [#allocation3], %s14
      %s17 = sshll.u32 [#allocation2], 4
      %s18 = int_to_ptr.vmem [resolvable:$true] %s17
      %20 = dma.hbm_to_vmem [thread:$0]  %s0, 128, %s18, [#allocation3]
    $region5: #{tpu_custom_call.1} parent=1 // pred_fallthru
      _
    // Predicated region
    $region6: #{tpu_custom_call.1} parent=1 // pred_check
      _
    $region7: #{tpu_custom_call.1} parent=1 // pred_check_branch
      %22 = sbr.rel (0) target = $region9
    $region8: #{tpu_custom_call.1} parent=1 // pred_region
      %s24 = ssub.s32 2048, 2048
      %25 = vsyncadd [#allocation6], %s24
      %s26 = sshll.u32 [#allocation5], 4
      %s27 = int_to_ptr.vmem [resolvable:$true] %s26
      %32 = dma.hbm_to_vmem [thread:$0]  %s1, 2048, %s27, [#allocation6], 128, 128, 8
    $region9: #{tpu_custom_call.1} parent=1 // pred_fallthru
      _
    // Predicated region
    $region10: #{tpu_custom_call.1} parent=1 // pred_check
      _
    $region11: #{tpu_custom_call.1} parent=1 // pred_check_branch
      %34 = sbr.rel (0) target = $region13
    $region12: #{tpu_custom_call.1} parent=1 // pred_region
      _
    $region13: #{tpu_custom_call.1} parent=1 // pred_fallthru
      _
    // Predicated region
    $region14: #{tpu_custom_call.1} parent=1 // pred_check
      _
    $region15: #{tpu_custom_call.1} parent=1 // pred_check_branch
      %36 = sbr.rel (0) target = $region17
    $region16: #{tpu_custom_call.1} parent=1 // pred_region
      %37 = dma.done [#allocation3], 128
    $region17: #{tpu_custom_call.1} parent=1 // pred_fallthru
      _
    // Predicated region
    $region18: #{tpu_custom_call.1} parent=1 // pred_check
      _
    $region19: #{tpu_custom_call.1} parent=1 // pred_check_branch
      %39 = sbr.rel (0) target = $region21
    $region20: #{tpu_custom_call.1} parent=1 // pred_region
      %40 = dma.done [#allocation6], 2048
    $region21: #{tpu_custom_call.1} parent=1 // pred_fallthru
      _
    %v41 = vld [vmem:[#allocation2] sm:$0xff]
    %v42 = vld [vmem:[#allocation5] sm:$0xff]
    %v43 = vld [vmem:[#allocation5 + $0x8] sm:$0xff]
    %v44 = vld [vmem:[#allocation5 + $0x10] sm:$0xff]
    %v45 = vld [vmem:[#allocation5 + $0x18] sm:$0xff]
    %v46 = vld [vmem:[#allocation5 + $0x20] sm:$0xff]
    %v47 = vld [vmem:[#allocation5 + $0x28] sm:$0xff]
    %v48 = vld [vmem:[#allocation5 + $0x30] sm:$0xff]
    %v49 = vld [vmem:[#allocation5 + $0x38] sm:$0xff]
    %v50 = vld [vmem:[#allocation5 + $0x40] sm:$0xff]
    %v51 = vld [vmem:[#allocation5 + $0x48] sm:$0xff]
    %v52 = vld [vmem:[#allocation5 + $0x50] sm:$0xff]
    %v53 = vld [vmem:[#allocation5 + $0x58] sm:$0xff]
    %v54 = vld [vmem:[#allocation5 + $0x60] sm:$0xff]
    %v55 = vld [vmem:[#allocation5 + $0x68] sm:$0xff]
    %v56 = vld [vmem:[#allocation5 + $0x70] sm:$0xff]
    %v57 = vld [vmem:[#allocation5 + $0x78] sm:$0xff]
    %v58 = vld [vmem:[%s2] sm:$0x1]
    %v60 = vlaneseq
    %v61 = vshrl.u32 %v60, 7
    %v62 = vsub.s32 0, %v61
    %v63 = vrot.slane %v58, %v62
    %65 = vmatprep.subr.mxu0 0.0
    %66 = vmatpush1.msra.mxu0 %v57
    %67 = vmatprep.subr.mxu0 0.0
    %68 = vmatpush1.msra.mxu0 %v56
    %69 = vmatprep.subr.mxu0 0.0
    %70 = vmatpush1.msra.mxu0 %v55
    %71 = vmatprep.subr.mxu0 0.0
    %72 = vmatpush1.msra.mxu0 %v54
    %73 = vmatprep.subr.mxu0 0.0
    %74 = vmatpush1.msra.mxu0 %v53
    %75 = vmatprep.subr.mxu0 0.0
    %76 = vmatpush1.msra.mxu0 %v52
    %77 = vmatprep.subr.mxu0 0.0
    %78 = vmatpush1.msra.mxu0 %v51
    %79 = vmatprep.subr.mxu0 0.0
    %80 = vmatpush1.msra.mxu0 %v50
    %81 = vmatprep.subr.mxu0 0.0
    %82 = vmatpush1.msra.mxu0 %v49
    %83 = vmatprep.subr.mxu0 0.0
    %84 = vmatpush1.msra.mxu0 %v48
    %85 = vmatprep.subr.mxu0 0.0
    %86 = vmatpush1.msra.mxu0 %v47
    %87 = vmatprep.subr.mxu0 0.0
    %88 = vmatpush1.msra.mxu0 %v46
    %89 = vmatprep.subr.mxu0 0.0
    %90 = vmatpush1.msra.mxu0 %v45
    %91 = vmatprep.subr.mxu0 0.0
    %92 = vmatpush1.msra.mxu0 %v44
    %93 = vmatprep.subr.mxu0 0.0
    %94 = vmatpush1.msra.mxu0 %v43
    %95 = vmatprep.subr.mxu0 0.0
    %96 = vmatpush1.msra.mxu0 %v42
    %97 = vmatprep.subr.mxu0 0.0
    %98 = vmatpush2.msra.mxu0 0.0
    %99 = vmatprep.subr.mxu0 0.0
    %100 = vmatpush2.msra.mxu0 0.0
    %101 = vmatprep.subr.mxu0 0.0
    %102 = vmatpush2.msra.mxu0 0.0
    %103 = vmatprep.subr.mxu0 0.0
    %104 = vmatpush2.msra.mxu0 0.0
    %105 = vmatprep.subr.mxu0 0.0
    %106 = vmatpush2.msra.mxu0 0.0
    %107 = vmatprep.subr.mxu0 0.0
    %108 = vmatpush2.msra.mxu0 0.0
    %109 = vmatprep.subr.mxu0 0.0
    %110 = vmatpush2.msra.mxu0 0.0
    %111 = vmatprep.subr.mxu0 0.0
    %112 = vmatpush2.msra.mxu0 0.0
    %113 = vmatprep.subr.mxu0 0.0
    %114 = vmatpush2.msra.mxu0 0.0
    %115 = vmatprep.subr.mxu0 0.0
    %116 = vmatpush2.msra.mxu0 0.0
    %117 = vmatprep.subr.mxu0 0.0
    %118 = vmatpush2.msra.mxu0 0.0
    %119 = vmatprep.subr.mxu0 0.0
    %120 = vmatpush2.msra.mxu0 0.0
    %121 = vmatprep.subr.mxu0 0.0
    %122 = vmatpush2.msra.mxu0 0.0
    %123 = vmatprep.subr.mxu0 0.0
    %124 = vmatpush2.msra.mxu0 0.0
    %125 = vmatprep.subr.mxu0 0.0
    %126 = vmatpush2.msra.mxu0 0.0
    %127 = vmatprep.subr.mxu0 0.0
    %128 = vmatpush2.msra.mxu0 0.0
    %129 = vmatprep.mubr.f32.mxu0 0.0
    %130 = vmatmul.mubr.f32.gmra.mxu0 %v41
    %v131 = vpop.f32.mrf.mxu0
    %v132 = vadd.f32 %v63, %v131
    %v133 = vpop.f32.mrf.mxu0
    %134 = vdwg.mxu0
    %135 = vst [vmem:[#allocation7] sm:$0xff] %v132
    // Predicated region
    $region22: #{tpu_custom_call.1} parent=1 // pred_check
      _
    $region23: #{tpu_custom_call.1} parent=1 // pred_check_branch
      %137 = sbr.rel (0) target = $region25
    $region24: #{tpu_custom_call.1} parent=1 // pred_region
      %s139 = ssub.s32 128, 128
      %140 = vsyncadd [#allocation4], %s139
      %s142 = sshll.u32 [#allocation7], 4
      %s143 = int_to_ptr.vmem [resolvable:$true] %s142
      %145 = dma.vmem_to_hbm [thread:$0]  %s143, 128, %s3, [#allocation4]
    $region25: #{tpu_custom_call.1} parent=1 // pred_fallthru
      _
    // Predicated region
    $region26: #{tpu_custom_call.1} parent=1 // pred_check
      _
    $region27: #{tpu_custom_call.1} parent=1 // pred_check_branch
      %147 = sbr.rel (0) target = $region29
    $region28: #{tpu_custom_call.1} parent=1 // pred_region
      %148 = dma.done [#allocation4], 128
    $region29: #{tpu_custom_call.1} parent=1 // pred_fallthru
      _
    %149 = vsyncpa [#allocation3], 1
    %150 = vsyncpa [#allocation6], 1
    %151 = vsyncpa [#allocation4], 1

</llo_original>
